<compile_context>
chip_gen: v7x
topology: tpu7x:2x2x1
jax: 0.10.0
libtpu: 0.0.40
codegen_flags: <defaults>
</compile_context>

<pallas_src>
import math

import jax
import jax.numpy as jnp
from jax.experimental import pallas as pl
from jax.experimental.pallas import tpu as pltpu

# -------------------- hyper-parameters ("args") --------------------
B             = 2      # batch
SEQ_DIM       = 4      # K  (number of features)
SEQ_LEN       = 8      # L
DIFF_STEPS    = 4
DIFF_LAYERS   = 2
RES_CH        = 8
SKIP_CH       = 8      # kept == RES_CH (out-projection splits 2*RES_CH into res+skip)
STEP_EMB_DIM  = 16
C_STEP        = 16
POS_EMB_DIM   = 16
FEA_EMB_DIM   = 16
UNCONDITIONAL = False
C_SIDE        = POS_EMB_DIM + FEA_EMB_DIM                       # 32 (pos+fea)
C_COND        = C_SIDE + (0 if UNCONDITIONAL else 1)            # 33
BETA_START    = 1e-4
BETA_END      = 0.02
MISSING_RATIO = 0.3

# -------------------- activation-block row layout (C, N) --------------------
# rows 0..5 : data, noise, cond_mask, loss_mask, a_t (bcast), b_t (bcast)
# rows 6..7 : zero padding (8-align the side block)
# rows 8..39: side info (pos emb 16 + fea emb 16), transposed
# rows 40..55: sinusoidal diffusion-step embedding, pre-broadcast to rows
ROW_SIDE  = 8
ROW_TEMB  = ROW_SIDE + C_SIDE            # 40
ACT_ROWS  = ROW_TEMB + C_STEP            # 56

# -------------------- weight-slab layout (rows x 128 lanes) --------------------
def _align8(n):
    return -(-n // 8) * 8

_SLAB_BLOCKS = (
    ('sw1',   STEP_EMB_DIM),             # step MLP layer 1:  (16, C_STEP) + bias col
    ('sw2',   STEP_EMB_DIM),             # step MLP layer 2:  (16, 16)     + bias col
    ('stepw', RES_CH * DIFF_LAYERS),     # fused step proj:   (R*nl, 16)   + bias col
    ('inw',   RES_CH),                   # input conv:        (R, 2)       + bias col
    ('condw', 2 * RES_CH * DIFF_LAYERS), # fused cond proj:   (2R*nl, 32) + mask col + bias col
    ('midw',  2 * RES_CH * DIFF_LAYERS), # per-layer mid:     nl x [(2R, R) + bias col]
    ('outw',  2 * RES_CH * DIFF_LAYERS), # per-layer out:     nl x [(2R, R) + bias col]
    ('sk1w',  SKIP_CH),                  # skip proj 1:       (R, R)       + bias col
    ('sk2w',  SKIP_CH),                  # skip proj 2:       (R, 1) col, bias at [off, 1]
)
SLAB_OFF = {}
_o = 0
for _n, _r in _SLAB_BLOCKS:
    SLAB_OFF[_n] = _o
    _o += _align8(_r)
SLAB_ROWS  = _o                          # 168
SLAB_LANES = 128


# ==================== the single fused Pallas kernel ====================

def _csdi_fused_kernel(act_ref, w_ref, loss_ref):
    """act_ref: (ACT_ROWS, N) activations, channels on sublanes, rows on lanes.
    w_ref: (SLAB_ROWS, 128) packed weight slab.  loss_ref: (1, 1) in SMEM."""
    f32 = jnp.float32
    R  = RES_CH
    nl = DIFF_LAYERS
    N  = act_ref.shape[1]

    def wmat(off, rows, cols):           # static slice -> (rows, cols) weight
        return w_ref[off:off + rows, 0:cols]

    def wcol(off, rows, col):            # static slice -> (rows, 1) bias/extra column
        return w_ref[off:off + rows, col:col + 1]

    elem  = act_ref[0:8, :]
    data  = elem[0:1, :]
    noise = elem[1:2, :]
    mask  = elem[2:3, :]
    lmask = elem[3:4, :]
    a_c   = elem[4:5, :]
    b_c   = elem[5:6, :]
    sideT = act_ref[ROW_SIDE:ROW_SIDE + C_SIDE, :]       # (32, N)
    tembT = act_ref[ROW_TEMB:ROW_TEMB + C_STEP, :]       # (16, N)

    # ---- q_sample + set_input_to_diffmodel ----
    noisy     = a_c * data + b_c * noise
    cond_obs  = mask * data
    noisy_tgt = (1.0 - mask) * noisy

    # ---- input 1x1 conv (2 -> R): VPU broadcast-MAC, channels on sublanes ----
    o = SLAB_OFF['inw']
    x = jnp.maximum(wcol(o, R, 0) * cond_obs
                    + wcol(o, R, 1) * noisy_tgt
                    + wcol(o, R, 2), 0.0)                # (R, N)

    # ---- diffusion-step embedding MLP (per-row, SiLU) + fused step projections ----
    # TODO(synk): CSDI_Net source is not provided; SiLU assumed (canonical CSDI
    # DiffusionEmbedding uses F.silu).
    o = SLAB_OFF['sw1']
    h = jnp.dot(wmat(o, STEP_EMB_DIM, C_STEP), tembT,
                preferred_element_type=f32) + wcol(o, STEP_EMB_DIM, C_STEP)
    h = h * jax.nn.sigmoid(h)
    o = SLAB_OFF['sw2']
    h = jnp.dot(wmat(o, STEP_EMB_DIM, STEP_EMB_DIM), h,
                preferred_element_type=f32) + wcol(o, STEP_EMB_DIM, STEP_EMB_DIM)
    h = h * jax.nn.sigmoid(h)
    o = SLAB_OFF['stepw']
    sp_rows = (jnp.dot(wmat(o, R * nl, STEP_EMB_DIM), h,
                       preferred_element_type=f32)
               + wcol(o, R * nl, STEP_EMB_DIM))          # (R*nl, N)

    # ---- fused conditioner projections (32 side channels via MXU, mask via VPU) ----
    o = SLAB_OFF['condw']
    cond_all = (jnp.dot(wmat(o, 2 * R * nl, C_SIDE), sideT, preferred_element_type=f32)
                + wcol(o, 2 * R * nl, C_SIDE) * mask
                + wcol(o, 2 * R * nl, C_SIDE + 1))       # (2R*nl, N)

    # ---- gated residual layers (static unroll) ----
    inv_sqrt2 = 1.0 / math.sqrt(2.0)
    skip = jnp.zeros((R, N), f32)
    for l in range(nl):
        om = SLAB_OFF['midw'] + l * 2 * R
        oo = SLAB_OFF['outw'] + l * 2 * R
        y = x + sp_rows[l * R:(l + 1) * R, :]
        y = jnp.dot(wmat(om, 2 * R, R), y, preferred_element_type=f32) + wcol(om, 2 * R, R)
        y = y + cond_all[l * 2 * R:(l + 1) * 2 * R, :]
        g = jax.nn.sigmoid(y[:R, :]) * jnp.tanh(y[R:, :])                       # (R, N)
        out = jnp.dot(wmat(oo, 2 * R, R), g, preferred_element_type=f32) + wcol(oo, 2 * R, R)
        x = (x + out[:R, :]) * inv_sqrt2
        skip = skip + out[R:, :]

    # ---- skip head ----
    skip = skip * (1.0 / math.sqrt(float(nl)))
    o = SLAB_OFF['sk1w']
    h2 = jnp.maximum(jnp.dot(wmat(o, R, R), skip, preferred_element_type=f32)
                     + wcol(o, R, R), 0.0)               # (R, N)
    # final (R -> 1) conv as a sublane reduction (no 1-row MXU push)
    o = SLAB_OFF['sk2w']
    pred = jnp.sum(wcol(o, R, 0) * h2, axis=0, keepdims=True) + w_ref[o:o + 1, 1:2]  # (1, N)

    # ---- masked MSE over loss_mask-selected entries ----
    # TODO(synk): torch boolean gather `noise[loss_mask]` has data-dependent size;
    # implemented as an equivalent masked-MSE reduction (assumes loss_fn = MSELoss).
    # max(cnt, 1) guards the (PyTorch would NaN) empty-target case.
    diff = (noise - pred) * lmask
    sse = jnp.sum(diff * diff)
    cnt = jnp.sum(lmask)
    loss_ref[0, 0] = sse / jnp.maximum(cnt, 1.0)


def csdi_forward_fused(act, slab):
    """Single grid-less pallas_call: 2 input DMAs (activation block + weight slab),
    scalar loss returned through SMEM."""
    out = pl.pallas_call(
        _csdi_fused_kernel,
        out_shape=jax.ShapeDtypeStruct((1, 1), jnp.float32),
        out_specs=pl.BlockSpec(memory_space=pltpu.MemorySpace.SMEM),
    )(act, slab)
    return out[0, 0]


# ==================== plain-JAX glue (matches Model methods) ====================

def make_diffusion_buffers():
    betas = jnp.linspace(BETA_START, BETA_END, DIFF_STEPS, dtype=jnp.float32)
    alphas = 1.0 - betas
    acp = jnp.cumprod(alphas)
    acp_prev = jnp.pad(acp[:-1], (1, 0), constant_values=1.0)
    return dict(
        betas=betas,
        alphas_cumprod=acp,
        alphas_cumprod_prev=acp_prev,
        sqrt_alphas=jnp.sqrt(alphas),
        sqrt_betas=jnp.sqrt(betas),
        sqrt_alphas_cumprod=jnp.sqrt(acp),
        sqrt_one_minus_alphas_cumprod=jnp.sqrt(1.0 - acp),
        sqrt_recip_alphas=jnp.sqrt(1.0 / alphas),
        posterior_variance=betas * (1.0 - acp_prev) / (1.0 - acp),
    )


def get_mask_rm(key, observed_mask, missing_ratio):
    # TODO(synk): per-sample topk with data-dependent count kept in plain JAX
    # (argsort-based); no clean fixed-shape Pallas equivalent.
    Bn = observed_mask.shape[0]
    rand = jax.random.uniform(key, observed_mask.shape) * observed_mask
    flat = rand.reshape(Bn, -1)
    num_observed = observed_mask.reshape(Bn, -1).sum(axis=1)
    num_masked = jnp.round(num_observed * missing_ratio)
    order = jnp.argsort(-flat, axis=1)
    ranks = jnp.argsort(order, axis=1)              # rank in descending order
    flat = jnp.where(ranks < num_masked[:, None], -1.0, flat)
    return (flat > 0).reshape(observed_mask.shape).astype(jnp.float32)


def time_embedding(pos, d_model):
    position = pos[..., None].astype(jnp.float32)
    div_term = 1.0 / jnp.power(10000.0,
                               jnp.arange(0, d_model, 2).astype(jnp.float32) / d_model)
    pe = jnp.zeros((pos.shape[0], pos.shape[1], d_model), jnp.float32)
    pe = pe.at[:, :, 0::2].set(jnp.sin(position * div_term))
    pe = pe.at[:, :, 1::2].set(jnp.cos(position * div_term))
    return pe


def build_side_pefe(fea_table, Bn, K, L):
    """Positional + feature embeddings, flattened to (N, 32); mask conditioning
    channel is applied inside the fused kernel."""
    observed_step = jnp.broadcast_to(jnp.arange(L)[None, :], (Bn, L))
    te = time_embedding(observed_step, POS_EMB_DIM)                        # (B, L, pos)
    te = jnp.broadcast_to(te[:, None, :, :], (Bn, K, L, POS_EMB_DIM))
    fe = jnp.broadcast_to(fea_table[None, :, None, :], (Bn, K, L, FEA_EMB_DIM))
    side = jnp.concatenate([te, fe], axis=-1)                              # (B, K, L, 32)
    return side.reshape(Bn * K * L, C_SIDE)


def diffusion_step_embedding(t, dim):
    half = dim // 2
    freqs = 10.0 ** (jnp.arange(half, dtype=jnp.float32) * 4.0 / max(half - 1, 1))
    args = t[:, None].astype(jnp.float32) / freqs[None, :]
    return jnp.concatenate([jnp.sin(args), jnp.cos(args)], axis=-1)        # (B, dim)


# ==================== Model.forward(mode='train') ====================
# TODO(synk): CSDI_Net's temporal/feature transformer blocks (n_heads, e_layers,
# d_ff, activation, dropout, factor, distil) are not defined in the provided
# source; this uses the standard CSDI/DiffWave 1x1-conv gated residual skeleton
# with the same channel plumbing (input proj, step-emb cond, side-info cond,
# gated activation, residual+skip, output projections).

def forward_train(params, slab, buffers, input_data, key):
    data_raw, obs_raw, gt_raw = input_data                    # each (B, L, K)
    data = jnp.transpose(data_raw, (0, 2, 1))                 # (B, K, L)
    obs_mask = jnp.transpose(obs_raw, (0, 2, 1))
    Bn, K, L = data.shape
    N = Bn * K * L

    k_t, k_mask, k_noise = jax.random.split(key, 3)
    t = jax.random.randint(k_t, (Bn,), 0, DIFF_STEPS)

    # p_losses (train_missing_ratio_fixed=True)
    mask = get_mask_rm(k_mask, obs_mask, MISSING_RATIO)
    noise = jax.random.normal(k_noise, data.shape, jnp.float32)
    loss_mask = (obs_mask - mask).astype(jnp.float32)

    a_t = buffers['sqrt_alphas_cumprod'][t]                               # (B,)
    b_t = buffers['sqrt_one_minus_alphas_cumprod'][t]                     # (B,)

    # per-batch scalars / step embedding pre-broadcast to rows (free in XLA;
    # removes all in-kernel one-hot broadcast matmuls)
    a_rows = jnp.broadcast_to(a_t[:, None], (Bn, K * L)).reshape(1, N)
    b_rows = jnp.broadcast_to(b_t[:, None], (Bn, K * L)).reshape(1, N)
    temb0 = diffusion_step_embedding(t, C_STEP)                           # (B, C_STEP)
    temb_rows_t = jnp.broadcast_to(
        temb0[:, None, :], (Bn, K * L, C_STEP)).reshape(N, C_STEP).T      # (C_STEP, N)

    side_pefe_t = build_side_pefe(params['fea_embed'], Bn, K, L).T        # (C_SIDE, N)

    act = jnp.concatenate([
        data.reshape(1, N),
        noise.reshape(1, N),
        mask.reshape(1, N),
        loss_mask.reshape(1, N),
        a_rows,
        b_rows,
        jnp.zeros((2, N), jnp.float32),                                   # 8-align side block
        side_pefe_t,
        temb_rows_t,
    ], axis=0).astype(jnp.float32)                                        # (ACT_ROWS, N)

    # prep (q_sample + masking) + diffusion net + masked MSE: one Pallas kernel
    return csdi_forward_fused(act, slab)


# ==================== deterministic parameter init + slab packing ====================

def init_params(key):
    def lin(k, cin, cout):
        kw, kb = jax.random.split(k)
        s = 1.0 / math.sqrt(cin)
        return (jax.random.uniform(kw, (cin, cout), jnp.float32, -s, s),
                jax.random.uniform(kb, (cout,), jnp.float32, -s, s))

    ks = iter(jax.random.split(key, 32))
    p = {}
    p['fea_embed'] = jax.random.normal(next(ks), (SEQ_DIM, FEA_EMB_DIM), jnp.float32)
    p['step_w1'], p['step_b1'] = lin(next(ks), C_STEP, STEP_EMB_DIM)
    p['step_w2'], p['step_b2'] = lin(next(ks), STEP_EMB_DIM, STEP_EMB_DIM)
    p['in_w'], p['in_b'] = lin(next(ks), 1 if UNCONDITIONAL else 2, RES_CH)
    for l in range(DIFF_LAYERS):
        p[f'l{l}_step_w'], p[f'l{l}_step_b'] = lin(next(ks), STEP_EMB_DIM, RES_CH)
        p[f'l{l}_mid_w'],  p[f'l{l}_mid_b']  = lin(next(ks), RES_CH, 2 * RES_CH)
        p[f'l{l}_cond_w'], p[f'l{l}_cond_b'] = lin(next(ks), C_COND, 2 * RES_CH)
        p[f'l{l}_out_w'],  p[f'l{l}_out_b']  = lin(next(ks), RES_CH, 2 * RES_CH)
    p['skip1_w'], p['skip1_b'] = lin(next(ks), SKIP_CH, SKIP_CH)
    p['skip2_w'], p['skip2_b'] = lin(next(ks), SKIP_CH, 1)
    return p


def pack_params(p):
    """One-time packing of every weight/bias into a single (SLAB_ROWS, 128) f32
    slab: each W^T block starts at an 8-aligned sublane, biases / extra channels
    stored in the lane columns directly after the weight."""
    nl, R = DIFF_LAYERS, RES_CH
    slab = jnp.zeros((SLAB_ROWS, SLAB_LANES), jnp.float32)

    def put(slab, off, w_t, bias=None, extra=None):
        rows, cols = w_t.shape
        slab = slab.at[off:off + rows, 0:cols].set(w_t)
        col = cols
        if extra is not None:
            for e in extra:
                slab = slab.at[off:off + rows, col:col + 1].set(e.reshape(rows, 1))
                col += 1
        if bias is not None:
            slab = slab.at[off:off + rows, col:col + 1].set(bias.reshape(rows, 1))
        return slab

    slab = put(slab, SLAB_OFF['sw1'], p['step_w1'].T, p['step_b1'])
    slab = put(slab, SLAB_OFF['sw2'], p['step_w2'].T, p['step_b2'])

    stepw = jnp.concatenate([p[f'l{l}_step_w'] for l in range(nl)], axis=1).T   # (R*nl, 16)
    stepb = jnp.concatenate([p[f'l{l}_step_b'] for l in range(nl)])
    slab = put(slab, SLAB_OFF['stepw'], stepw, stepb)

    slab = put(slab, SLAB_OFF['inw'], p['in_w'].T, p['in_b'])

    condw  = jnp.concatenate([p[f'l{l}_cond_w'][:C_SIDE] for l in range(nl)], axis=1).T  # (2R*nl, 32)
    condwm = jnp.concatenate([p[f'l{l}_cond_w'][C_SIDE:] for l in range(nl)], axis=1).T  # (2R*nl, 1)
    condb  = jnp.concatenate([p[f'l{l}_cond_b'] for l in range(nl)])
    slab = put(slab, SLAB_OFF['condw'], condw, condb, extra=[condwm])

    for l in range(nl):
        slab = put(slab, SLAB_OFF['midw'] + l * 2 * R, p[f'l{l}_mid_w'].T, p[f'l{l}_mid_b'])
        slab = put(slab, SLAB_OFF['outw'] + l * 2 * R, p[f'l{l}_out_w'].T, p[f'l{l}_out_b'])

    slab = put(slab, SLAB_OFF['sk1w'], p['skip1_w'].T, p['skip1_b'])
    # skip2: (R, 1) weight column at lane 0, bias scalar at [off, 1]
    o = SLAB_OFF['sk2w']
    slab = slab.at[o:o + R, 0:1].set(p['skip2_w'])
    slab = slab.at[o, 1].set(p['skip2_b'][0])
    return slab


# ==================== main ====================

if __name__ == "__main__":
    root = jax.random.PRNGKey(0)
    k_param, k_data, k_obs, k_gt, k_fwd = jax.random.split(root, 5)

    params = init_params(k_param)
    slab = pack_params(params)
    buffers = make_diffusion_buffers()

    # input_data = (data, obs_mask, gt_mask), each (B, L, K) as in the PyTorch dataloader
    data = jax.random.normal(k_data, (B, SEQ_LEN, SEQ_DIM), jnp.float32)
    obs_mask = (jax.random.uniform(k_obs, (B, SEQ_LEN, SEQ_DIM)) > 0.1).astype(jnp.float32)
    gt_mask = obs_mask * (jax.random.uniform(k_gt, (B, SEQ_LEN, SEQ_DIM)) > 0.3).astype(jnp.float32)

    fwd = jax.jit(forward_train)
    loss = fwd(params, slab, buffers, (data, obs_mask, gt_mask), k_fwd)
    jax.block_until_ready(loss)
    assert jnp.isfinite(loss)
    print("KERNEL_OK")
</pallas_src>

<mosaic_0001>
module attributes {stable_mosaic.version = 11 : i64} {
  func.func @_csdi_fused_kernel(%arg0: memref<56x64xf32, #tpu.memory_space<vmem>>, %arg1: memref<168x128xf32, #tpu.memory_space<vmem>>, %arg2: memref<1x1xf32, #tpu.memory_space<smem>>) attributes {dimension_semantics = [], scalar_prefetch = 0 : i64, scratch_operands = 0 : i64, tpu.core_type = #tpu.core_type<tc>} {
    %c0 = arith.constant 0 : index
    %c0_0 = arith.constant 0 : index
    %0 = vector.load %arg0[%c0, %c0_0] : memref<56x64xf32, #tpu.memory_space<vmem>>, vector<8x64xf32>
    %1 = vector.extract_strided_slice %0 {offsets = [0, 0], sizes = [1, 64], strides = [1, 1]} : vector<8x64xf32> to vector<1x64xf32>
    %2 = vector.extract_strided_slice %0 {offsets = [1, 0], sizes = [1, 64], strides = [1, 1]} : vector<8x64xf32> to vector<1x64xf32>
    %3 = vector.extract_strided_slice %0 {offsets = [2, 0], sizes = [1, 64], strides = [1, 1]} : vector<8x64xf32> to vector<1x64xf32>
    %4 = vector.extract_strided_slice %0 {offsets = [3, 0], sizes = [1, 64], strides = [1, 1]} : vector<8x64xf32> to vector<1x64xf32>
    %5 = vector.extract_strided_slice %0 {offsets = [4, 0], sizes = [1, 64], strides = [1, 1]} : vector<8x64xf32> to vector<1x64xf32>
    %6 = vector.extract_strided_slice %0 {offsets = [5, 0], sizes = [1, 64], strides = [1, 1]} : vector<8x64xf32> to vector<1x64xf32>
    %c8 = arith.constant 8 : index
    %c0_1 = arith.constant 0 : index
    %7 = vector.load %arg0[%c8, %c0_1] : memref<56x64xf32, #tpu.memory_space<vmem>>, vector<32x64xf32>
    %c40 = arith.constant 40 : index
    %c0_2 = arith.constant 0 : index
    %8 = vector.load %arg0[%c40, %c0_2] : memref<56x64xf32, #tpu.memory_space<vmem>>, vector<16x64xf32>
    %9 = arith.mulf %5, %1 : vector<1x64xf32>
    %10 = arith.mulf %6, %2 : vector<1x64xf32>
    %11 = arith.addf %9, %10 : vector<1x64xf32>
    %12 = arith.mulf %3, %1 : vector<1x64xf32>
    %cst = arith.constant 1.000000e+00 : f32
    %13 = vector.broadcast %cst : f32 to vector<1x64xf32>
    %14 = arith.subf %13, %3 : vector<1x64xf32>
    %15 = arith.mulf %14, %11 : vector<1x64xf32>
    %c48 = arith.constant 48 : index
    %c0_3 = arith.constant 0 : index
    %16 = vector.load %arg1[%c48, %c0_3] : memref<168x128xf32, #tpu.memory_space<vmem>>, vector<8x1xf32>
    %17 = vector.broadcast %16 : vector<8x1xf32> to vector<8x64xf32>
    %18 = vector.broadcast %12 : vector<1x64xf32> to vector<8x64xf32>
    %19 = arith.mulf %17, %18 : vector<8x64xf32>
    %c48_4 = arith.constant 48 : index
    %c1 = arith.constant 1 : index
    %20 = vector.load %arg1[%c48_4, %c1] : memref<168x128xf32, #tpu.memory_space<vmem>>, vector<8x1xf32>
    %21 = vector.broadcast %20 : vector<8x1xf32> to vector<8x64xf32>
    %22 = vector.broadcast %15 : vector<1x64xf32> to vector<8x64xf32>
    %23 = arith.mulf %21, %22 : vector<8x64xf32>
    %24 = arith.addf %19, %23 : vector<8x64xf32>
    %c48_5 = arith.constant 48 : index
    %c2 = arith.constant 2 : index
    %25 = vector.load %arg1[%c48_5, %c2] : memref<168x128xf32, #tpu.memory_space<vmem>>, vector<8x1xf32>
    %26 = vector.broadcast %25 : vector<8x1xf32> to vector<8x64xf32>
    %27 = arith.addf %24, %26 : vector<8x64xf32>
    %cst_6 = arith.constant 0.000000e+00 : f32
    %28 = vector.broadcast %cst_6 : f32 to vector<8x64xf32>
    %29 = arith.maximumf %27, %28 : vector<8x64xf32>
    %c0_7 = arith.constant 0 : index
    %c0_8 = arith.constant 0 : index
    %30 = vector.load %arg1[%c0_7, %c0_8] : memref<168x128xf32, #tpu.memory_space<vmem>>, vector<16x16xf32>
    %cst_9 = arith.constant dense<0.000000e+00> : vector<16x64xf32>
    %31 = tpu.matmul %30, %8, %cst_9 {dimension_numbers = #tpu.dot_dimension_numbers<[1], [0], [0], [1], [0, 0, 1, 1], [], []>} : vector<16x16xf32>, vector<16x64xf32>, vector<16x64xf32> -> vector<16x64xf32>
    %c0_10 = arith.constant 0 : index
    %c16 = arith.constant 16 : index
    %32 = vector.load %arg1[%c0_10, %c16] : memref<168x128xf32, #tpu.memory_space<vmem>>, vector<16x1xf32>
    %33 = vector.broadcast %32 : vector<16x1xf32> to vector<16x64xf32>
    %34 = arith.addf %31, %33 : vector<16x64xf32>
    %35 = arith.negf %34 : vector<16x64xf32>
    %36 = math.exp %35 : vector<16x64xf32>
    %cst_11 = arith.constant 1.000000e+00 : f32
    %37 = vector.broadcast %cst_11 : f32 to vector<16x64xf32>
    %38 = arith.addf %37, %36 : vector<16x64xf32>
    %39 = arith.divf %37, %38 : vector<16x64xf32>
    %40 = arith.mulf %34, %39 : vector<16x64xf32>
    %c16_12 = arith.constant 16 : index
    %c0_13 = arith.constant 0 : index
    %41 = vector.load %arg1[%c16_12, %c0_13] : memref<168x128xf32, #tpu.memory_space<vmem>>, vector<16x16xf32>
    %cst_14 = arith.constant dense<0.000000e+00> : vector<16x64xf32>
    %42 = tpu.matmul %41, %40, %cst_14 {dimension_numbers = #tpu.dot_dimension_numbers<[1], [0], [0], [1], [0, 0, 1, 1], [], []>} : vector<16x16xf32>, vector<16x64xf32>, vector<16x64xf32> -> vector<16x64xf32>
    %c16_15 = arith.constant 16 : index
    %c16_16 = arith.constant 16 : index
    %43 = vector.load %arg1[%c16_15, %c16_16] : memref<168x128xf32, #tpu.memory_space<vmem>>, vector<16x1xf32>
    %44 = vector.broadcast %43 : vector<16x1xf32> to vector<16x64xf32>
    %45 = arith.addf %42, %44 : vector<16x64xf32>
    %46 = arith.negf %45 : vector<16x64xf32>
    %47 = math.exp %46 : vector<16x64xf32>
    %cst_17 = arith.constant 1.000000e+00 : f32
    %48 = vector.broadcast %cst_17 : f32 to vector<16x64xf32>
    %49 = arith.addf %48, %47 : vector<16x64xf32>
    %50 = arith.divf %48, %49 : vector<16x64xf32>
    %51 = arith.mulf %45, %50 : vector<16x64xf32>
    %c32 = arith.constant 32 : index
    %c0_18 = arith.constant 0 : index
    %52 = vector.load %arg1[%c32, %c0_18] : memref<168x128xf32, #tpu.memory_space<vmem>>, vector<16x16xf32>
    %cst_19 = arith.constant dense<0.000000e+00> : vector<16x64xf32>
    %53 = tpu.matmul %52, %51, %cst_19 {dimension_numbers = #tpu.dot_dimension_numbers<[1], [0], [0], [1], [0, 0, 1, 1], [], []>} : vector<16x16xf32>, vector<16x64xf32>, vector<16x64xf32> -> vector<16x64xf32>
    %c32_20 = arith.constant 32 : index
    %c16_21 = arith.constant 16 : index
    %54 = vector.load %arg1[%c32_20, %c16_21] : memref<168x128xf32, #tpu.memory_space<vmem>>, vector<16x1xf32>
    %55 = vector.broadcast %54 : vector<16x1xf32> to vector<16x64xf32>
    %56 = arith.addf %53, %55 : vector<16x64xf32>
    %c56 = arith.constant 56 : index
    %c0_22 = arith.constant 0 : index
    %57 = vector.load %arg1[%c56, %c0_22] : memref<168x128xf32, #tpu.memory_space<vmem>>, vector<32x32xf32>
    %cst_23 = arith.constant dense<0.000000e+00> : vector<32x64xf32>
    %58 = tpu.matmul %57, %7, %cst_23 {dimension_numbers = #tpu.dot_dimension_numbers<[1], [0], [0], [1], [0, 0, 1, 1], [], []>} : vector<32x32xf32>, vector<32x64xf32>, vector<32x64xf32> -> vector<32x64xf32>
    %c56_24 = arith.constant 56 : index
    %c32_25 = arith.constant 32 : index
    %59 = vector.load %arg1[%c56_24, %c32_25] : memref<168x128xf32, #tpu.memory_space<vmem>>, vector<32x1xf32>
    %60 = vector.broadcast %59 : vector<32x1xf32> to vector<32x64xf32>
    %61 = vector.broadcast %3 : vector<1x64xf32> to vector<32x64xf32>
    %62 = arith.mulf %60, %61 : vector<32x64xf32>
    %63 = arith.addf %58, %62 : vector<32x64xf32>
    %c56_26 = arith.constant 56 : index
    %c33 = arith.constant 33 : index
    %64 = vector.load %arg1[%c56_26, %c33] : memref<168x128xf32, #tpu.memory_space<vmem>>, vector<32x1xf32>
    %65 = vector.broadcast %64 : vector<32x1xf32> to vector<32x64xf32>
    %66 = arith.addf %63, %65 : vector<32x64xf32>
    %cst_27 = arith.constant 0.000000e+00 : f32
    %67 = vector.broadcast %cst_27 : f32 to vector<8x64xf32>
    %68 = vector.extract_strided_slice %56 {offsets = [0, 0], sizes = [8, 64], strides = [1, 1]} : vector<16x64xf32> to vector<8x64xf32>
    %69 = arith.addf %29, %68 : vector<8x64xf32>
    %c88 = arith.constant 88 : index
    %c0_28 = arith.constant 0 : index
    %70 = vector.load %arg1[%c88, %c0_28] : memref<168x128xf32, #tpu.memory_space<vmem>>, vector<16x8xf32>
    %cst_29 = arith.constant dense<0.000000e+00> : vector<16x64xf32>
    %71 = tpu.matmul %70, %69, %cst_29 {dimension_numbers = #tpu.dot_dimension_numbers<[1], [0], [0], [1], [0, 0, 1, 1], [], []>} : vector<16x8xf32>, vector<8x64xf32>, vector<16x64xf32> -> vector<16x64xf32>
    %c88_30 = arith.constant 88 : index
    %c8_31 = arith.constant 8 : index
    %72 = vector.load %arg1[%c88_30, %c8_31] : memref<168x128xf32, #tpu.memory_space<vmem>>, vector<16x1xf32>
    %73 = vector.broadcast %72 : vector<16x1xf32> to vector<16x64xf32>
    %74 = arith.addf %71, %73 : vector<16x64xf32>
    %75 = vector.extract_strided_slice %66 {offsets = [0, 0], sizes = [16, 64], strides = [1, 1]} : vector<32x64xf32> to vector<16x64xf32>
    %76 = arith.addf %74, %75 : vector<16x64xf32>
    %77 = vector.extract_strided_slice %76 {offsets = [0, 0], sizes = [8, 64], strides = [1, 1]} : vector<16x64xf32> to vector<8x64xf32>
    %78 = arith.negf %77 : vector<8x64xf32>
    %79 = math.exp %78 : vector<8x64xf32>
    %cst_32 = arith.constant 1.000000e+00 : f32
    %80 = vector.broadcast %cst_32 : f32 to vector<8x64xf32>
    %81 = arith.addf %80, %79 : vector<8x64xf32>
    %82 = arith.divf %80, %81 : vector<8x64xf32>
    %83 = vector.extract_strided_slice %76 {offsets = [8, 0], sizes = [8, 64], strides = [1, 1]} : vector<16x64xf32> to vector<8x64xf32>
    %84 = math.tanh %83 : vector<8x64xf32>
    %85 = arith.mulf %82, %84 : vector<8x64xf32>
    %c120 = arith.constant 120 : index
    %c0_33 = arith.constant 0 : index
    %86 = vector.load %arg1[%c120, %c0_33] : memref<168x128xf32, #tpu.memory_space<vmem>>, vector<16x8xf32>
    %cst_34 = arith.constant dense<0.000000e+00> : vector<16x64xf32>
    %87 = tpu.matmul %86, %85, %cst_34 {dimension_numbers = #tpu.dot_dimension_numbers<[1], [0], [0], [1], [0, 0, 1, 1], [], []>} : vector<16x8xf32>, vector<8x64xf32>, vector<16x64xf32> -> vector<16x64xf32>
    %c120_35 = arith.constant 120 : index
    %c8_36 = arith.constant 8 : index
    %88 = vector.load %arg1[%c120_35, %c8_36] : memref<168x128xf32, #tpu.memory_space<vmem>>, vector<16x1xf32>
    %89 = vector.broadcast %88 : vector<16x1xf32> to vector<16x64xf32>
    %90 = arith.addf %87, %89 : vector<16x64xf32>
    %91 = vector.extract_strided_slice %90 {offsets = [0, 0], sizes = [8, 64], strides = [1, 1]} : vector<16x64xf32> to vector<8x64xf32>
    %92 = arith.addf %29, %91 : vector<8x64xf32>
    %cst_37 = arith.constant 0.707106769 : f32
    %93 = vector.broadcast %cst_37 : f32 to vector<8x64xf32>
    %94 = arith.mulf %92, %93 : vector<8x64xf32>
    %95 = vector.extract_strided_slice %90 {offsets = [8, 0], sizes = [8, 64], strides = [1, 1]} : vector<16x64xf32> to vector<8x64xf32>
    %96 = arith.addf %67, %95 : vector<8x64xf32>
    %97 = vector.extract_strided_slice %56 {offsets = [8, 0], sizes = [8, 64], strides = [1, 1]} : vector<16x64xf32> to vector<8x64xf32>
    %98 = arith.addf %94, %97 : vector<8x64xf32>
    %c104 = arith.constant 104 : index
    %c0_38 = arith.constant 0 : index
    %99 = vector.load %arg1[%c104, %c0_38] : memref<168x128xf32, #tpu.memory_space<vmem>>, vector<16x8xf32>
    %cst_39 = arith.constant dense<0.000000e+00> : vector<16x64xf32>
    %100 = tpu.matmul %99, %98, %cst_39 {dimension_numbers = #tpu.dot_dimension_numbers<[1], [0], [0], [1], [0, 0, 1, 1], [], []>} : vector<16x8xf32>, vector<8x64xf32>, vector<16x64xf32> -> vector<16x64xf32>
    %c104_40 = arith.constant 104 : index
    %c8_41 = arith.constant 8 : index
    %101 = vector.load %arg1[%c104_40, %c8_41] : memref<168x128xf32, #tpu.memory_space<vmem>>, vector<16x1xf32>
    %102 = vector.broadcast %101 : vector<16x1xf32> to vector<16x64xf32>
    %103 = arith.addf %100, %102 : vector<16x64xf32>
    %104 = vector.extract_strided_slice %66 {offsets = [16, 0], sizes = [16, 64], strides = [1, 1]} : vector<32x64xf32> to vector<16x64xf32>
    %105 = arith.addf %103, %104 : vector<16x64xf32>
    %106 = vector.extract_strided_slice %105 {offsets = [0, 0], sizes = [8, 64], strides = [1, 1]} : vector<16x64xf32> to vector<8x64xf32>
    %107 = arith.negf %106 : vector<8x64xf32>
    %108 = math.exp %107 : vector<8x64xf32>
    %cst_42 = arith.constant 1.000000e+00 : f32
    %109 = vector.broadcast %cst_42 : f32 to vector<8x64xf32>
    %110 = arith.addf %109, %108 : vector<8x64xf32>
    %111 = arith.divf %109, %110 : vector<8x64xf32>
    %112 = vector.extract_strided_slice %105 {offsets = [8, 0], sizes = [8, 64], strides = [1, 1]} : vector<16x64xf32> to vector<8x64xf32>
    %113 = math.tanh %112 : vector<8x64xf32>
    %114 = arith.mulf %111, %113 : vector<8x64xf32>
    %c136 = arith.constant 136 : index
    %c0_43 = arith.constant 0 : index
    %115 = vector.load %arg1[%c136, %c0_43] : memref<168x128xf32, #tpu.memory_space<vmem>>, vector<16x8xf32>
    %cst_44 = arith.constant dense<0.000000e+00> : vector<16x64xf32>
    %116 = tpu.matmul %115, %114, %cst_44 {dimension_numbers = #tpu.dot_dimension_numbers<[1], [0], [0], [1], [0, 0, 1, 1], [], []>} : vector<16x8xf32>, vector<8x64xf32>, vector<16x64xf32> -> vector<16x64xf32>
    %c136_45 = arith.constant 136 : index
    %c8_46 = arith.constant 8 : index
    %117 = vector.load %arg1[%c136_45, %c8_46] : memref<168x128xf32, #tpu.memory_space<vmem>>, vector<16x1xf32>
    %118 = vector.broadcast %117 : vector<16x1xf32> to vector<16x64xf32>
    %119 = arith.addf %116, %118 : vector<16x64xf32>
    %120 = vector.extract_strided_slice %119 {offsets = [8, 0], sizes = [8, 64], strides = [1, 1]} : vector<16x64xf32> to vector<8x64xf32>
    %121 = arith.addf %96, %120 : vector<8x64xf32>
    %cst_47 = arith.constant 0.707106769 : f32
    %122 = vector.broadcast %cst_47 : f32 to vector<8x64xf32>
    %123 = arith.mulf %121, %122 : vector<8x64xf32>
    %c152 = arith.constant 152 : index
    %c0_48 = arith.constant 0 : index
    %124 = vector.load %arg1[%c152, %c0_48] : memref<168x128xf32, #tpu.memory_space<vmem>>, vector<8x8xf32>
    %cst_49 = arith.constant dense<0.000000e+00> : vector<8x64xf32>
    %125 = tpu.matmul %124, %123, %cst_49 {dimension_numbers = #tpu.dot_dimension_numbers<[1], [0], [0], [1], [0, 0, 1, 1], [], []>} : vector<8x8xf32>, vector<8x64xf32>, vector<8x64xf32> -> vector<8x64xf32>
    %c152_50 = arith.constant 152 : index
    %c8_51 = arith.constant 8 : index
    %126 = vector.load %arg1[%c152_50, %c8_51] : memref<168x128xf32, #tpu.memory_space<vmem>>, vector<8x1xf32>
    %127 = vector.broadcast %126 : vector<8x1xf32> to vector<8x64xf32>
    %128 = arith.addf %125, %127 : vector<8x64xf32>
    %cst_52 = arith.constant 0.000000e+00 : f32
    %129 = vector.broadcast %cst_52 : f32 to vector<8x64xf32>
    %130 = arith.maximumf %128, %129 : vector<8x64xf32>
    %c160 = arith.constant 160 : index
    %c0_53 = arith.constant 0 : index
    %131 = vector.load %arg1[%c160, %c0_53] : memref<168x128xf32, #tpu.memory_space<vmem>>, vector<8x1xf32>
    %132 = vector.broadcast %131 : vector<8x1xf32> to vector<8x64xf32>
    %133 = arith.mulf %132, %130 : vector<8x64xf32>
    %cst_54 = arith.constant dense<0.000000e+00> : vector<64xf32>
    %134 = vector.multi_reduction <add>, %133, %cst_54 [0] : vector<8x64xf32> to vector<64xf32>
    %135 = vector.shape_cast %134 : vector<64xf32> to vector<1x64xf32>
    %c160_55 = arith.constant 160 : index
    %c1_56 = arith.constant 1 : index
    %136 = vector.load %arg1[%c160_55, %c1_56] : memref<168x128xf32, #tpu.memory_space<vmem>>, vector<1x1xf32>
    %137 = vector.broadcast %136 : vector<1x1xf32> to vector<1x64xf32>
    %138 = arith.addf %135, %137 : vector<1x64xf32>
    %139 = arith.subf %2, %138 : vector<1x64xf32>
    %140 = arith.mulf %139, %4 : vector<1x64xf32>
    %141 = arith.mulf %140, %140 : vector<1x64xf32>
    %142 = vector.shape_cast %141 : vector<1x64xf32> to vector<1x1x64xf32>
    %cst_57 = arith.constant dense<0.000000e+00> : vector<1xf32>
    %143 = vector.multi_reduction <add>, %142, %cst_57 [1, 2] : vector<1x1x64xf32> to vector<1xf32>
    %144 = vector.shape_cast %143 : vector<1xf32> to vector<1x1x1xf32>
    %145 = vector.extract %144[0, 0, 0] : f32 from vector<1x1x1xf32>
    %146 = vector.shape_cast %4 : vector<1x64xf32> to vector<1x1x64xf32>
    %cst_58 = arith.constant dense<0.000000e+00> : vector<1xf32>
    %147 = vector.multi_reduction <add>, %146, %cst_58 [1, 2] : vector<1x1x64xf32> to vector<1xf32>
    %148 = vector.shape_cast %147 : vector<1xf32> to vector<1x1x1xf32>
    %149 = vector.extract %148[0, 0, 0] : f32 from vector<1x1x1xf32>
    %cst_59 = arith.constant 1.000000e+00 : f32
    %150 = arith.maximumf %149, %cst_59 : f32
    %151 = arith.divf %145, %150 : f32
    %c0_60 = arith.constant 0 : index
    %c0_61 = arith.constant 0 : index
    %152 = memref.load %arg2[%c0_60, %c0_61] : memref<1x1xf32, #tpu.memory_space<smem>>
    memref.store %151, %arg2[%c0_60, %c0_61] : memref<1x1xf32, #tpu.memory_space<smem>>
    return
  }
}

</mosaic_0001>

<llo_original>
// kernel: neg.1
$region0: #{neg.1}
  #allocation0 [shape = 's32[1]{0}', space=sflag, size = 0x4, scoped, tag = 'scoped memory for neg.1']
  %s0 = inlined_call_operand.vmem [shape: f32[2,32], index: 0, kind: input, shape index: {}]
  %s1 = inlined_call_operand.vmem [shape: f32[2,32], index: 1, kind: output, shape index: {}]
  %v2 = vld [vmem:[%s0] sm:$0x3]
  %3 = xla_tuple %v2
  %4 = xla_tuple %3
  %v5 = vxor.u32 %v2, 2147483648
  %6 = xla_tuple %v5
  %7 = vst [vmem:[%s1] sm:$0x3] %v5

// kernel: forward_train.3
$region0: #{forward_train.3}
  #allocation0 [shape = 'u32[]', space=smem, size = 0x4, offset = 0x4, fixed_abs, tag = 'smem constant byte address 0x4 - core index']
  #allocation1 [shape = 'u32[144,128]{1,0:T(1,128)}', space=vmem, size = 0x12000, scoped, tag = 'internal scratch']
  %s0 = inlined_call_operand.vmem [shape: f32[56,64], index: 0, kind: input, shape index: {}]
  %s1 = inlined_call_operand.vmem [shape: f32[168,128], index: 1, kind: input, shape index: {}]
  %s2 = inlined_call_operand.hbm [shape: f32[1,1], index: 2, kind: output, shape index: {}]
  %s3 = sld [smem:[#allocation0]]
  $region18: #{forward_train.3} parent=0
    _
  %s5 = ssub.s32 1, %s3
  %s6 = scalar_select 0, %s5, %s3
  $region1: #{forward_train.3} parent=0
    #allocation2 [shape = 'u8[512]{0}', space=smem, size = 0x200, scoped, tag = 'output window, operand 0, single buffered']
    #allocation3 [shape = 's32[1]{0}', space=sflag, size = 0x4, scoped, tag = 'scoped memory for forward_train.3']
    %7 = vsyncpa [#allocation3], 0
    // Predicated region
    $region2: #{forward_train.3} parent=1 // pred_check
      _
    $region3: #{forward_train.3} parent=1 // pred_check_branch
      %9 = sbr.rel (0) target = $region5
    $region4: #{forward_train.3} parent=1 // pred_region
      _
    $region5: #{forward_train.3} parent=1 // pred_fallthru
      _
    // Predicated region
    $region6: #{forward_train.3} parent=1 // pred_check
      _
    $region7: #{forward_train.3} parent=1 // pred_check_branch
      %11 = sbr.rel (0) target = $region9
    $region8: #{forward_train.3} parent=1 // pred_region
      _
    $region9: #{forward_train.3} parent=1 // pred_fallthru
      _
    %v12 = vld [vmem:[%s0] sm:$0xff]
    %v13 = vld [vmem:[%s0 + $0x8] sm:$0xff]
    %v14 = vld [vmem:[%s0 + $0x10] sm:$0xff]
    %v15 = vld [vmem:[%s0 + $0x18] sm:$0xff]
    %v16 = vld [vmem:[%s0 + $0x20] sm:$0xff]
    %v17 = vld [vmem:[%s0 + $0x28] sm:$0xff]
    %v18 = vld [vmem:[%s0 + $0x30] sm:$0xff]
    %v20 = vrot.slane %v12, 4
    %v22 = vmul.f32 %v12, %v20
    %v24 = vrot.slane %v22, 1
    %v26 = vadd.f32 %v22, %v24
    %v27 = vrot.slane %v12, 6
    %v29 = vmul.f32 %v12, %v27
    %v30 = vsub.f32 1.0, %v12
    %v32 = vrot.slane %v26, 2
    %v34 = vmul.f32 %v30, %v32
    %v35 = vld [vmem:[%s1 + $0x30] sm:$0xff]
    %37 = vset.pattern.permute.xlu0 0
    %38 = vperm.xlu0 %37, %v35
    %v39 = vpop.permute.xlu0 %38
    %v41 = vlaneseq
    %v42 = vshrl.u32 %v41, 7
    %v43 = vsub.s32 2, %v42
    %v44 = vrot.slane %v29, %v43
    %v45 = vmul.f32 %v39, %v44
    %46 = vset.pattern.permute.xlu0 1
    %47 = vperm.xlu0 %46, %v35
    %v48 = vpop.permute.xlu0 %47
    %v50 = vlaneseq
    %v51 = vshrl.u32 %v50, 7
    %v52 = vsub.s32 2, %v51
    %v53 = vrot.slane %v34, %v52
    %v54 = vmul.f32 %v48, %v53
    %v55 = vadd.f32 %v45, %v54
    %56 = vset.pattern.permute.xlu0 2
    %57 = vperm.xlu0 %56, %v35
    %v58 = vpop.permute.xlu0 %57
    %v60 = vadd.f32 %v55, %v58
    %v61 = vmax.f32 %v60, 0.0
    %v62 = vld [vmem:[%s1] sm:$0xff]
    %v63 = vld [vmem:[%s1 + $0x8] sm:$0xff]
    %65 = vset.pattern.permute.xlu0 16
    %66 = vperm.xlu0 %65, %v62
    %v67 = vpop.permute.xlu0 %66
    %70 = vset.pattern.permute.xlu0 16
    %71 = vperm.xlu0 %70, %v63
    %v72 = vpop.permute.xlu0 %71
    %vm74 = vcmask 130048
    %v75 = vsel %vm74, %v62, 0
    %v77 = vsel %vm74, %v63, 0
    %79 = vmatprep.subr.mxu0 0.0
    %80 = vmatpush1.msra.mxu0 %v17
    %81 = vmatprep.subr.mxu0 0.0
    %82 = vmatpush1.msra.mxu0 %v18
    %83 = vmatprep.subr.mxu0 0.0
    %84 = vmatpush1.msra.mxu0 0.0
    %85 = vmatprep.subr.mxu0 0.0
    %86 = vmatpush1.msra.mxu0 0.0
    %87 = vmatprep.subr.mxu0 0.0
    %88 = vmatpush1.msra.mxu0 0.0
    %89 = vmatprep.subr.mxu0 0.0
    %90 = vmatpush1.msra.mxu0 0.0
    %91 = vmatprep.subr.mxu0 0.0
    %92 = vmatpush1.msra.mxu0 0.0
    %93 = vmatprep.subr.mxu0 0.0
    %94 = vmatpush1.msra.mxu0 0.0
    %95 = vmatprep.subr.mxu0 0.0
    %96 = vmatpush1.msra.mxu0 0.0
    %97 = vmatprep.subr.mxu0 0.0
    %98 = vmatpush1.msra.mxu0 0.0
    %99 = vmatprep.subr.mxu0 0.0
    %100 = vmatpush1.msra.mxu0 0.0
    %101 = vmatprep.subr.mxu0 0.0
    %102 = vmatpush1.msra.mxu0 0.0
    %103 = vmatprep.subr.mxu0 0.0
    %104 = vmatpush1.msra.mxu0 0.0
    %105 = vmatprep.subr.mxu0 0.0
    %106 = vmatpush1.msra.mxu0 0.0
    %107 = vmatprep.subr.mxu0 0.0
    %108 = vmatpush1.msra.mxu0 0.0
    %109 = vmatprep.subr.mxu0 0.0
    %110 = vmatpush1.msra.mxu0 0.0
    %111 = vmatprep.subr.mxu0 0.0
    %112 = vmatpush1.msra.mxu0 0.0
    %113 = vmatprep.subr.mxu0 0.0
    %114 = vmatpush1.msra.mxu0 0.0
    %115 = vmatprep.subr.mxu0 0.0
    %116 = vmatpush1.msra.mxu0 0.0
    %117 = vmatprep.subr.mxu0 0.0
    %118 = vmatpush1.msra.mxu0 0.0
    %119 = vmatprep.subr.mxu0 0.0
    %120 = vmatpush1.msra.mxu0 0.0
    %121 = vmatprep.subr.mxu0 0.0
    %122 = vmatpush1.msra.mxu0 0.0
    %123 = vmatprep.subr.mxu0 0.0
    %124 = vmatpush1.msra.mxu0 0.0
    %125 = vmatprep.subr.mxu0 0.0
    %126 = vmatpush1.msra.mxu0 0.0
    %127 = vmatprep.subr.mxu0 0.0
    %128 = vmatpush1.msra.mxu0 0.0
    %129 = vmatprep.subr.mxu0 0.0
    %130 = vmatpush1.msra.mxu0 0.0
    %131 = vmatprep.subr.mxu0 0.0
    %132 = vmatpush1.msra.mxu0 0.0
    %133 = vmatprep.subr.mxu0 0.0
    %134 = vmatpush1.msra.mxu0 0.0
    %135 = vmatprep.subr.mxu0 0.0
    %136 = vmatpush1.msra.mxu0 0.0
    %137 = vmatprep.subr.mxu0 0.0
    %138 = vmatpush1.msra.mxu0 0.0
    %139 = vmatprep.subr.mxu0 0.0
    %140 = vmatpush1.msra.mxu0 0.0
    %141 = vmatprep.subr.mxu0 0.0
    %142 = vmatpush1.msra.mxu0 0.0
    %143 = vmatprep.mubr.f32.mxu0 0.0
    %144 = vmatmul.mubr.f32.gmra.mrb[0].mxu0 %v75
    %v145 = vpop.f32.mrb[0].mxu0
    %v146 = vadd.f32 %v67, %v145
    %v147 = vpop.f32.mrb[0].mxu0
    %148 = vmatprep.mubr.f32.mxu0 0.0
    %149 = vmatmul.mubr.f32.gmra.mrb[0].mxu0 %v77
    %v150 = vpop.f32.mrb[0].mxu0
    %v151 = vadd.f32 %v72, %v150
    %v152 = vpop.f32.mrb[0].mxu0
    %153 = vdwg.mxu0
    %v154 = vxor.u32 %v146, 2147483648
    %v155 = vxor.u32 %v151, 2147483648
    %v156 = vmul.f32 %v154, 1.442695
    %v157 = vpow.pop %v156
    %v158 = vmul.f32 %v155, 1.442695
    %v159 = vpow.pop %v158
    %v160 = vadd.f32 %v157, 1.0
    %v161 = vadd.f32 %v159, 1.0
    %v162 = vrcp.pop %v160
    %v163 = vmul.f32 1.0, %v162
    %v164 = vrcp.pop %v161
    %v165 = vmul.f32 1.0, %v164
    %v166 = vmul.f32 %v146, %v163
    %v167 = vmul.f32 %v151, %v165
    %v168 = vld [vmem:[%s1 + $0x10] sm:$0xff]
    %v169 = vld [vmem:[%s1 + $0x18] sm:$0xff]
    %171 = vset.pattern.permute.xlu0 16
    %172 = vperm.xlu0 %171, %v168
    %v173 = vpop.permute.xlu0 %172
    %176 = vset.pattern.permute.xlu0 16
    %177 = vperm.xlu0 %176, %v169
    %v178 = vpop.permute.xlu0 %177
    %v180 = vsel %vm74, %v168, 0
    %v182 = vsel %vm74, %v169, 0
    %184 = vmatprep.subr.mxu0 0.0
    %185 = vmatpush1.msra.mxu0 %v166
    %186 = vmatprep.subr.mxu0 0.0
    %187 = vmatpush1.msra.mxu0 %v167
    %188 = vmatprep.subr.mxu0 0.0
    %189 = vmatpush1.msra.mxu0 0.0
    %190 = vmatprep.subr.mxu0 0.0
    %191 = vmatpush1.msra.mxu0 0.0
    %192 = vmatprep.subr.mxu0 0.0
    %193 = vmatpush1.msra.mxu0 0.0
    %194 = vmatprep.subr.mxu0 0.0
    %195 = vmatpush1.msra.mxu0 0.0
    %196 = vmatprep.subr.mxu0 0.0
    %197 = vmatpush1.msra.mxu0 0.0
    %198 = vmatprep.subr.mxu0 0.0
    %199 = vmatpush1.msra.mxu0 0.0
    %200 = vmatprep.subr.mxu0 0.0
    %201 = vmatpush1.msra.mxu0 0.0
    %202 = vmatprep.subr.mxu0 0.0
    %203 = vmatpush1.msra.mxu0 0.0
    %204 = vmatprep.subr.mxu0 0.0
    %205 = vmatpush1.msra.mxu0 0.0
    %206 = vmatprep.subr.mxu0 0.0
    %207 = vmatpush1.msra.mxu0 0.0
    %208 = vmatprep.subr.mxu0 0.0
    %209 = vmatpush1.msra.mxu0 0.0
    %210 = vmatprep.subr.mxu0 0.0
    %211 = vmatpush1.msra.mxu0 0.0
    %212 = vmatprep.subr.mxu0 0.0
    %213 = vmatpush1.msra.mxu0 0.0
    %214 = vmatprep.subr.mxu0 0.0
    %215 = vmatpush1.msra.mxu0 0.0
    %216 = vmatprep.subr.mxu0 0.0
    %217 = vmatpush1.msra.mxu0 0.0
    %218 = vmatprep.subr.mxu0 0.0
    %219 = vmatpush1.msra.mxu0 0.0
    %220 = vmatprep.subr.mxu0 0.0
    %221 = vmatpush1.msra.mxu0 0.0
    %222 = vmatprep.subr.mxu0 0.0
    %223 = vmatpush1.msra.mxu0 0.0
    %224 = vmatprep.subr.mxu0 0.0
    %225 = vmatpush1.msra.mxu0 0.0
    %226 = vmatprep.subr.mxu0 0.0
    %227 = vmatpush1.msra.mxu0 0.0
    %228 = vmatprep.subr.mxu0 0.0
    %229 = vmatpush1.msra.mxu0 0.0
    %230 = vmatprep.subr.mxu0 0.0
    %231 = vmatpush1.msra.mxu0 0.0
    %232 = vmatprep.subr.mxu0 0.0
    %233 = vmatpush1.msra.mxu0 0.0
    %234 = vmatprep.subr.mxu0 0.0
    %235 = vmatpush1.msra.mxu0 0.0
    %236 = vmatprep.subr.mxu0 0.0
    %237 = vmatpush1.msra.mxu0 0.0
    %238 = vmatprep.subr.mxu0 0.0
    %239 = vmatpush1.msra.mxu0 0.0
    %240 = vmatprep.subr.mxu0 0.0
    %241 = vmatpush1.msra.mxu0 0.0
    %242 = vmatprep.subr.mxu0 0.0
    %243 = vmatpush1.msra.mxu0 0.0
    %244 = vmatprep.subr.mxu0 0.0
    %245 = vmatpush1.msra.mxu0 0.0
    %246 = vmatprep.subr.mxu0 0.0
    %247 = vmatpush1.msra.mxu0 0.0
    %248 = vmatprep.mubr.f32.mxu0 0.0
    %249 = vmatmul.mubr.f32.gmra.mrb[0].mxu0 %v180
    %v250 = vpop.f32.mrb[0].mxu0
    %v251 = vadd.f32 %v173, %v250
    %v252 = vpop.f32.mrb[0].mxu0
    %253 = vmatprep.mubr.f32.mxu0 0.0
    %254 = vmatmul.mubr.f32.gmra.mrb[0].mxu0 %v182
    %v255 = vpop.f32.mrb[0].mxu0
    %v256 = vadd.f32 %v178, %v255
    %v257 = vpop.f32.mrb[0].mxu0
    %258 = vdwg.mxu0
    %v259 = vxor.u32 %v251, 2147483648
    %v260 = vxor.u32 %v256, 2147483648
    %v261 = vmul.f32 %v259, 1.442695
    %v262 = vpow.pop %v261
    %v263 = vmul.f32 %v260, 1.442695
    %v264 = vpow.pop %v263
    %v265 = vadd.f32 %v262, 1.0
    %v266 = vadd.f32 %v264, 1.0
    %v267 = vrcp.pop %v265
    %v268 = vmul.f32 1.0, %v267
    %v269 = vrcp.pop %v266
    %v270 = vmul.f32 1.0, %v269
    %v271 = vmul.f32 %v251, %v268
    %v272 = vmul.f32 %v256, %v270
    %v273 = vld [vmem:[%s1 + $0x20] sm:$0xff]
    %v274 = vld [vmem:[%s1 + $0x28] sm:$0xff]
    %276 = vset.pattern.permute.xlu0 16
    %277 = vperm.xlu0 %276, %v273
    %v278 = vpop.permute.xlu0 %277
    %281 = vset.pattern.permute.xlu0 16
    %282 = vperm.xlu0 %281, %v274
    %v283 = vpop.permute.xlu0 %282
    %v285 = vsel %vm74, %v273, 0
    %v287 = vsel %vm74, %v274, 0
    %289 = vmatprep.subr.mxu0 0.0
    %290 = vmatpush1.msra.mxu0 %v271
    %291 = vmatprep.subr.mxu0 0.0
    %292 = vmatpush1.msra.mxu0 %v272
    %293 = vmatprep.subr.mxu0 0.0
    %294 = vmatpush1.msra.mxu0 0.0
    %295 = vmatprep.subr.mxu0 0.0
    %296 = vmatpush1.msra.mxu0 0.0
    %297 = vmatprep.subr.mxu0 0.0
    %298 = vmatpush1.msra.mxu0 0.0
    %299 = vmatprep.subr.mxu0 0.0
    %300 = vmatpush1.msra.mxu0 0.0
    %301 = vmatprep.subr.mxu0 0.0
    %302 = vmatpush1.msra.mxu0 0.0
    %303 = vmatprep.subr.mxu0 0.0
    %304 = vmatpush1.msra.mxu0 0.0
    %305 = vmatprep.subr.mxu0 0.0
    %306 = vmatpush1.msra.mxu0 0.0
    %307 = vmatprep.subr.mxu0 0.0
    %308 = vmatpush1.msra.mxu0 0.0
    %309 = vmatprep.subr.mxu0 0.0
    %310 = vmatpush1.msra.mxu0 0.0
    %311 = vmatprep.subr.mxu0 0.0
    %312 = vmatpush1.msra.mxu0 0.0
    %313 = vmatprep.subr.mxu0 0.0
    %314 = vmatpush1.msra.mxu0 0.0
    %315 = vmatprep.subr.mxu0 0.0
    %316 = vmatpush1.msra.mxu0 0.0
    %317 = vmatprep.subr.mxu0 0.0
    %318 = vmatpush1.msra.mxu0 0.0
    %319 = vmatprep.subr.mxu0 0.0
    %320 = vmatpush1.msra.mxu0 0.0
    %321 = vmatprep.subr.mxu0 0.0
    %322 = vmatpush1.msra.mxu0 0.0
    %323 = vmatprep.subr.mxu0 0.0
    %324 = vmatpush1.msra.mxu0 0.0
    %325 = vmatprep.subr.mxu0 0.0
    %326 = vmatpush1.msra.mxu0 0.0
    %327 = vmatprep.subr.mxu0 0.0
    %328 = vmatpush1.msra.mxu0 0.0
    %329 = vmatprep.subr.mxu0 0.0
    %330 = vmatpush1.msra.mxu0 0.0
    %331 = vmatprep.subr.mxu0 0.0
    %332 = vmatpush1.msra.mxu0 0.0
    %333 = vmatprep.subr.mxu0 0.0
    %334 = vmatpush1.msra.mxu0 0.0
    %335 = vmatprep.subr.mxu0 0.0
    %336 = vmatpush1.msra.mxu0 0.0
    %337 = vmatprep.subr.mxu0 0.0
    %338 = vmatpush1.msra.mxu0 0.0
    %339 = vmatprep.subr.mxu0 0.0
    %340 = vmatpush1.msra.mxu0 0.0
    %341 = vmatprep.subr.mxu0 0.0
    %342 = vmatpush1.msra.mxu0 0.0
    %343 = vmatprep.subr.mxu0 0.0
    %344 = vmatpush1.msra.mxu0 0.0
    %345 = vmatprep.subr.mxu0 0.0
    %346 = vmatpush1.msra.mxu0 0.0
    %347 = vmatprep.subr.mxu0 0.0
    %348 = vmatpush1.msra.mxu0 0.0
    %349 = vmatprep.subr.mxu0 0.0
    %350 = vmatpush1.msra.mxu0 0.0
    %351 = vmatprep.subr.mxu0 0.0
    %352 = vmatpush1.msra.mxu0 0.0
    %353 = vmatprep.mubr.f32.mxu0 0.0
    %354 = vmatmul.mubr.f32.gmra.mrb[0].mxu0 %v285
    %v355 = vpop.f32.mrb[0].mxu0
    %v356 = vadd.f32 %v278, %v355
    %v357 = vpop.f32.mrb[0].mxu0
    %358 = vmatprep.mubr.f32.mxu0 0.0
    %359 = vmatmul.mubr.f32.gmra.mrb[0].mxu0 %v287
    %v360 = vpop.f32.mrb[0].mxu0
    %v361 = vadd.f32 %v283, %v360
    %v362 = vpop.f32.mrb[0].mxu0
    %363 = vdwg.mxu0
    %v364 = vld [vmem:[%s1 + $0x38] sm:$0xff]
    %v365 = vld [vmem:[%s1 + $0x40] sm:$0xff]
    %v366 = vld [vmem:[%s1 + $0x48] sm:$0xff]
    %v367 = vld [vmem:[%s1 + $0x50] sm:$0xff]
    %369 = vset.pattern.permute.xlu0 32
    %370 = vperm.xlu0 %369, %v364
    %v371 = vpop.permute.xlu0 %370
    %374 = vset.pattern.permute.xlu0 32
    %375 = vperm.xlu0 %374, %v365
    %v376 = vpop.permute.xlu0 %375
    %379 = vset.pattern.permute.xlu0 32
    %380 = vperm.xlu0 %379, %v366
    %v381 = vpop.permute.xlu0 %380
    %384 = vset.pattern.permute.xlu0 32
    %385 = vperm.xlu0 %384, %v367
    %v386 = vpop.permute.xlu0 %385
    %v388 = vlaneseq
    %v389 = vshrl.u32 %v388, 7
    %v390 = vsub.s32 2, %v389
    %v391 = vrot.slane %v12, %v390
    %v392 = vmul.f32 %v371, %v391
    %v393 = vmul.f32 %v376, %v391
    %v394 = vmul.f32 %v381, %v391
    %v395 = vmul.f32 %v386, %v391
    %vm396 = vcmask 261120
    %v397 = vsel %vm396, %v364, 0
    %v399 = vsel %vm396, %v365, 0
    %v401 = vsel %vm396, %v366, 0
    %v403 = vsel %vm396, %v367, 0
    %405 = vmatprep.subr.mxu0 0.0
    %406 = vmatpush1.msra.mxu0 %v13
    %407 = vmatprep.subr.mxu0 0.0
    %408 = vmatpush1.msra.mxu0 %v14
    %409 = vmatprep.subr.mxu0 0.0
    %410 = vmatpush1.msra.mxu0 %v15
    %411 = vmatprep.subr.mxu0 0.0
    %412 = vmatpush1.msra.mxu0 %v16
    %413 = vmatprep.subr.mxu0 0.0
    %414 = vmatpush1.msra.mxu0 0.0
    %415 = vmatprep.subr.mxu0 0.0
    %416 = vmatpush1.msra.mxu0 0.0
    %417 = vmatprep.subr.mxu0 0.0
    %418 = vmatpush1.msra.mxu0 0.0
    %419 = vmatprep.subr.mxu0 0.0
    %420 = vmatpush1.msra.mxu0 0.0
    %421 = vmatprep.subr.mxu0 0.0
    %422 = vmatpush1.msra.mxu0 0.0
    %423 = vmatprep.subr.mxu0 0.0
    %424 = vmatpush1.msra.mxu0 0.0
    %425 = vmatprep.subr.mxu0 0.0
    %426 = vmatpush1.msra.mxu0 0.0
    %427 = vmatprep.subr.mxu0 0.0
    %428 = vmatpush1.msra.mxu0 0.0
    %429 = vmatprep.subr.mxu0 0.0
    %430 = vmatpush1.msra.mxu0 0.0
    %431 = vmatprep.subr.mxu0 0.0
    %432 = vmatpush1.msra.mxu0 0.0
    %433 = vmatprep.subr.mxu0 0.0
    %434 = vmatpush1.msra.mxu0 0.0
    %435 = vmatprep.subr.mxu0 0.0
    %436 = vmatpush1.msra.mxu0 0.0
    %437 = vmatprep.subr.mxu0 0.0
    %438 = vmatpush1.msra.mxu0 0.0
    %439 = vmatprep.subr.mxu0 0.0
    %440 = vmatpush1.msra.mxu0 0.0
    %441 = vmatprep.subr.mxu0 0.0
    %442 = vmatpush1.msra.mxu0 0.0
    %443 = vmatprep.subr.mxu0 0.0
    %444 = vmatpush1.msra.mxu0 0.0
    %445 = vmatprep.subr.mxu0 0.0
    %446 = vmatpush1.msra.mxu0 0.0
    %447 = vmatprep.subr.mxu0 0.0
    %448 = vmatpush1.msra.mxu0 0.0
    %449 = vmatprep.subr.mxu0 0.0
    %450 = vmatpush1.msra.mxu0 0.0
    %451 = vmatprep.subr.mxu0 0.0
    %452 = vmatpush1.msra.mxu0 0.0
    %453 = vmatprep.subr.mxu0 0.0
    %454 = vmatpush1.msra.mxu0 0.0
    %455 = vmatprep.subr.mxu0 0.0
    %456 = vmatpush1.msra.mxu0 0.0
    %457 = vmatprep.subr.mxu0 0.0
    %458 = vmatpush1.msra.mxu0 0.0
    %459 = vmatprep.subr.mxu0 0.0
    %460 = vmatpush1.msra.mxu0 0.0
    %461 = vmatprep.subr.mxu0 0.0
    %462 = vmatpush1.msra.mxu0 0.0
    %463 = vmatprep.subr.mxu0 0.0
    %464 = vmatpush1.msra.mxu0 0.0
    %465 = vmatprep.subr.mxu0 0.0
    %466 = vmatpush1.msra.mxu0 0.0
    %467 = vmatprep.subr.mxu0 0.0
    %468 = vmatpush1.msra.mxu0 0.0
    %469 = vmatprep.mubr.f32.mxu0 0.0
    %470 = vmatmul.mubr.f32.gmra.mrb[0].mxu0 %v397
    %v471 = vpop.f32.mrb[0].mxu0
    %v472 = vadd.f32 %v392, %v471
    %v473 = vpop.f32.mrb[0].mxu0
    %474 = vmatprep.mubr.f32.mxu0 0.0
    %475 = vmatmul.mubr.f32.gmra.mrb[0].mxu0 %v399
    %v476 = vpop.f32.mrb[0].mxu0
    %v477 = vadd.f32 %v393, %v476
    %v478 = vpop.f32.mrb[0].mxu0
    %479 = vmatprep.mubr.f32.mxu0 0.0
    %480 = vmatmul.mubr.f32.gmra.mrb[0].mxu0 %v401
    %v481 = vpop.f32.mrb[0].mxu0
    %v482 = vadd.f32 %v394, %v481
    %v483 = vpop.f32.mrb[0].mxu0
    %484 = vmatprep.mubr.f32.mxu0 0.0
    %485 = vmatmul.mubr.f32.gmra.mrb[0].mxu0 %v403
    %v486 = vpop.f32.mrb[0].mxu0
    %v487 = vadd.f32 %v395, %v486
    %v488 = vpop.f32.mrb[0].mxu0
    %489 = vdwg.mxu0
    %490 = vset.pattern.permute.xlu0 33
    %491 = vperm.xlu0 %490, %v364
    %v492 = vpop.permute.xlu0 %491
    %494 = vset.pattern.permute.xlu0 33
    %495 = vperm.xlu0 %494, %v365
    %v496 = vpop.permute.xlu0 %495
    %498 = vset.pattern.permute.xlu0 33
    %499 = vperm.xlu0 %498, %v366
    %v500 = vpop.permute.xlu0 %499
    %502 = vset.pattern.permute.xlu0 33
    %503 = vperm.xlu0 %502, %v367
    %v504 = vpop.permute.xlu0 %503
    %v506 = vadd.f32 %v472, %v492
    %v507 = vadd.f32 %v477, %v496
    %v508 = vadd.f32 %v482, %v500
    %v509 = vadd.f32 %v487, %v504
    %v510 = vadd.f32 %v61, %v356
    %v511 = vld [vmem:[%s1 + $0x58] sm:$0xff]
    %v512 = vld [vmem:[%s1 + $0x60] sm:$0xff]
    %514 = vset.pattern.permute.xlu0 8
    %515 = vperm.xlu0 %514, %v511
    %v516 = vpop.permute.xlu0 %515
    %519 = vset.pattern.permute.xlu0 8
    %520 = vperm.xlu0 %519, %v512
    %v521 = vpop.permute.xlu0 %520
    %vm523 = vcmask 64512
    %v524 = vsel %vm523, %v511, 0
    %v526 = vsel %vm523, %v512, 0
    %528 = vmatprep.subr.mxu0 0.0
    %529 = vmatpush1.msra.mxu0 %v510
    %530 = vmatprep.subr.mxu0 0.0
    %531 = vmatpush1.msra.mxu0 0.0
    %532 = vmatprep.subr.mxu0 0.0
    %533 = vmatpush1.msra.mxu0 0.0
    %534 = vmatprep.subr.mxu0 0.0
    %535 = vmatpush1.msra.mxu0 0.0
    %536 = vmatprep.subr.mxu0 0.0
    %537 = vmatpush1.msra.mxu0 0.0
    %538 = vmatprep.subr.mxu0 0.0
    %539 = vmatpush1.msra.mxu0 0.0
    %540 = vmatprep.subr.mxu0 0.0
    %541 = vmatpush1.msra.mxu0 0.0
    %542 = vmatprep.subr.mxu0 0.0
    %543 = vmatpush1.msra.mxu0 0.0
    %544 = vmatprep.subr.mxu0 0.0
    %545 = vmatpush1.msra.mxu0 0.0
    %546 = vmatprep.subr.mxu0 0.0
    %547 = vmatpush1.msra.mxu0 0.0
    %548 = vmatprep.subr.mxu0 0.0
    %549 = vmatpush1.msra.mxu0 0.0
    %550 = vmatprep.subr.mxu0 0.0
    %551 = vmatpush1.msra.mxu0 0.0
    %552 = vmatprep.subr.mxu0 0.0
    %553 = vmatpush1.msra.mxu0 0.0
    %554 = vmatprep.subr.mxu0 0.0
    %555 = vmatpush1.msra.mxu0 0.0
    %556 = vmatprep.subr.mxu0 0.0
    %557 = vmatpush1.msra.mxu0 0.0
    %558 = vmatprep.subr.mxu0 0.0
    %559 = vmatpush1.msra.mxu0 0.0
    %560 = vmatprep.subr.mxu0 0.0
    %561 = vmatpush1.msra.mxu0 0.0
    %562 = vmatprep.subr.mxu0 0.0
    %563 = vmatpush1.msra.mxu0 0.0
    %564 = vmatprep.subr.mxu0 0.0
    %565 = vmatpush1.msra.mxu0 0.0
    %566 = vmatprep.subr.mxu0 0.0
    %567 = vmatpush1.msra.mxu0 0.0
    %568 = vmatprep.subr.mxu0 0.0
    %569 = vmatpush1.msra.mxu0 0.0
    %570 = vmatprep.subr.mxu0 0.0
    %571 = vmatpush1.msra.mxu0 0.0
    %572 = vmatprep.subr.mxu0 0.0
    %573 = vmatpush1.msra.mxu0 0.0
    %574 = vmatprep.subr.mxu0 0.0
    %575 = vmatpush1.msra.mxu0 0.0
    %576 = vmatprep.subr.mxu0 0.0
    %577 = vmatpush1.msra.mxu0 0.0
    %578 = vmatprep.subr.mxu0 0.0
    %579 = vmatpush1.msra.mxu0 0.0
    %580 = vmatprep.subr.mxu0 0.0
    %581 = vmatpush1.msra.mxu0 0.0
    %582 = vmatprep.subr.mxu0 0.0
    %583 = vmatpush1.msra.mxu0 0.0
    %584 = vmatprep.subr.mxu0 0.0
    %585 = vmatpush1.msra.mxu0 0.0
    %586 = vmatprep.subr.mxu0 0.0
    %587 = vmatpush1.msra.mxu0 0.0
    %588 = vmatprep.subr.mxu0 0.0
    %589 = vmatpush1.msra.mxu0 0.0
    %590 = vmatprep.subr.mxu0 0.0
    %591 = vmatpush1.msra.mxu0 0.0
    %592 = vmatprep.mubr.f32.mxu0 0.0
    %593 = vmatmul.mubr.f32.gmra.mrb[0].mxu0 %v524
    %v594 = vpop.f32.mrb[0].mxu0
    %v595 = vadd.f32 %v516, %v594
    %v596 = vpop.f32.mrb[0].mxu0
    %597 = vmatprep.mubr.f32.mxu0 0.0
    %598 = vmatmul.mubr.f32.gmra.mrb[0].mxu0 %v526
    %v599 = vpop.f32.mrb[0].mxu0
    %v600 = vadd.f32 %v521, %v599
    %v601 = vpop.f32.mrb[0].mxu0
    %602 = vdwg.mxu0
    %v603 = vadd.f32 %v595, %v506
    %v604 = vadd.f32 %v600, %v507
    %v605 = vxor.u32 %v603, 2147483648
    %v606 = vmul.f32 %v605, 1.442695
    %v607 = vpow.pop %v606
    %v608 = vadd.f32 %v607, 1.0
    %v609 = vrcp.pop %v608
    %v610 = vmul.f32 1.0, %v609
    %v611 = vtanh.pop %v604
    %v612 = vmul.f32 %v610, %v611
    %v613 = vld [vmem:[%s1 + $0x78] sm:$0xff]
    %v614 = vld [vmem:[%s1 + $0x80] sm:$0xff]
    %616 = vset.pattern.permute.xlu0 8
    %617 = vperm.xlu0 %616, %v613
    %v618 = vpop.permute.xlu0 %617
    %621 = vset.pattern.permute.xlu0 8
    %622 = vperm.xlu0 %621, %v614
    %v623 = vpop.permute.xlu0 %622
    %v625 = vsel %vm523, %v613, 0
    %v627 = vsel %vm523, %v614, 0
    %629 = vmatprep.subr.mxu0 0.0
    %630 = vmatpush1.msra.mxu0 %v612
    %631 = vmatprep.subr.mxu0 0.0
    %632 = vmatpush1.msra.mxu0 0.0
    %633 = vmatprep.subr.mxu0 0.0
    %634 = vmatpush1.msra.mxu0 0.0
    %635 = vmatprep.subr.mxu0 0.0
    %636 = vmatpush1.msra.mxu0 0.0
    %637 = vmatprep.subr.mxu0 0.0
    %638 = vmatpush1.msra.mxu0 0.0
    %639 = vmatprep.subr.mxu0 0.0
    %640 = vmatpush1.msra.mxu0 0.0
    %641 = vmatprep.subr.mxu0 0.0
    %642 = vmatpush1.msra.mxu0 0.0
    %643 = vmatprep.subr.mxu0 0.0
    %644 = vmatpush1.msra.mxu0 0.0
    %645 = vmatprep.subr.mxu0 0.0
    %646 = vmatpush1.msra.mxu0 0.0
    %647 = vmatprep.subr.mxu0 0.0
    %648 = vmatpush1.msra.mxu0 0.0
    %649 = vmatprep.subr.mxu0 0.0
    %650 = vmatpush1.msra.mxu0 0.0
    %651 = vmatprep.subr.mxu0 0.0
    %652 = vmatpush1.msra.mxu0 0.0
    %653 = vmatprep.subr.mxu0 0.0
    %654 = vmatpush1.msra.mxu0 0.0
    %655 = vmatprep.subr.mxu0 0.0
    %656 = vmatpush1.msra.mxu0 0.0
    %657 = vmatprep.subr.mxu0 0.0
    %658 = vmatpush1.msra.mxu0 0.0
    %659 = vmatprep.subr.mxu0 0.0
    %660 = vmatpush1.msra.mxu0 0.0
    %661 = vmatprep.subr.mxu0 0.0
    %662 = vmatpush1.msra.mxu0 0.0
    %663 = vmatprep.subr.mxu0 0.0
    %664 = vmatpush1.msra.mxu0 0.0
    %665 = vmatprep.subr.mxu0 0.0
    %666 = vmatpush1.msra.mxu0 0.0
    %667 = vmatprep.subr.mxu0 0.0
    %668 = vmatpush1.msra.mxu0 0.0
    %669 = vmatprep.subr.mxu0 0.0
    %670 = vmatpush1.msra.mxu0 0.0
    %671 = vmatprep.subr.mxu0 0.0
    %672 = vmatpush1.msra.mxu0 0.0
    %673 = vmatprep.subr.mxu0 0.0
    %674 = vmatpush1.msra.mxu0 0.0
    %675 = vmatprep.subr.mxu0 0.0
    %676 = vmatpush1.msra.mxu0 0.0
    %677 = vmatprep.subr.mxu0 0.0
    %678 = vmatpush1.msra.mxu0 0.0
    %679 = vmatprep.subr.mxu0 0.0
    %680 = vmatpush1.msra.mxu0 0.0
    %681 = vmatprep.subr.mxu0 0.0
    %682 = vmatpush1.msra.mxu0 0.0
    %683 = vmatprep.subr.mxu0 0.0
    %684 = vmatpush1.msra.mxu0 0.0
    %685 = vmatprep.subr.mxu0 0.0
    %686 = vmatpush1.msra.mxu0 0.0
    %687 = vmatprep.subr.mxu0 0.0
    %688 = vmatpush1.msra.mxu0 0.0
    %689 = vmatprep.subr.mxu0 0.0
    %690 = vmatpush1.msra.mxu0 0.0
    %691 = vmatprep.subr.mxu0 0.0
    %692 = vmatpush1.msra.mxu0 0.0
    %693 = vmatprep.mubr.f32.mxu0 0.0
    %694 = vmatmul.mubr.f32.gmra.mrb[0].mxu0 %v625
    %v695 = vpop.f32.mrb[0].mxu0
    %v696 = vadd.f32 %v618, %v695
    %v697 = vpop.f32.mrb[0].mxu0
    %698 = vmatprep.mubr.f32.mxu0 0.0
    %699 = vmatmul.mubr.f32.gmra.mrb[0].mxu0 %v627
    %v700 = vpop.f32.mrb[0].mxu0
    %v701 = vadd.f32 %v623, %v700
    %v702 = vpop.f32.mrb[0].mxu0
    %703 = vdwg.mxu0
    %v704 = vadd.f32 %v61, %v696
    %v705 = vmul.f32 %v704, 0.70710677
    %v706 = vadd.f32 %v701, 0.0
    %v707 = vadd.f32 %v705, %v361
    %v708 = vld [vmem:[%s1 + $0x68] sm:$0xff]
    %v709 = vld [vmem:[%s1 + $0x70] sm:$0xff]
    %711 = vset.pattern.permute.xlu0 8
    %712 = vperm.xlu0 %711, %v708
    %v713 = vpop.permute.xlu0 %712
    %716 = vset.pattern.permute.xlu0 8
    %717 = vperm.xlu0 %716, %v709
    %v718 = vpop.permute.xlu0 %717
    %v720 = vsel %vm523, %v708, 0
    %v722 = vsel %vm523, %v709, 0
    %724 = vmatprep.subr.mxu0 0.0
    %725 = vmatpush1.msra.mxu0 %v707
    %726 = vmatprep.subr.mxu0 0.0
    %727 = vmatpush1.msra.mxu0 0.0
    %728 = vmatprep.subr.mxu0 0.0
    %729 = vmatpush1.msra.mxu0 0.0
    %730 = vmatprep.subr.mxu0 0.0
    %731 = vmatpush1.msra.mxu0 0.0
    %732 = vmatprep.subr.mxu0 0.0
    %733 = vmatpush1.msra.mxu0 0.0
    %734 = vmatprep.subr.mxu0 0.0
    %735 = vmatpush1.msra.mxu0 0.0
    %736 = vmatprep.subr.mxu0 0.0
    %737 = vmatpush1.msra.mxu0 0.0
    %738 = vmatprep.subr.mxu0 0.0
    %739 = vmatpush1.msra.mxu0 0.0
    %740 = vmatprep.subr.mxu0 0.0
    %741 = vmatpush1.msra.mxu0 0.0
    %742 = vmatprep.subr.mxu0 0.0
    %743 = vmatpush1.msra.mxu0 0.0
    %744 = vmatprep.subr.mxu0 0.0
    %745 = vmatpush1.msra.mxu0 0.0
    %746 = vmatprep.subr.mxu0 0.0
    %747 = vmatpush1.msra.mxu0 0.0
    %748 = vmatprep.subr.mxu0 0.0
    %749 = vmatpush1.msra.mxu0 0.0
    %750 = vmatprep.subr.mxu0 0.0
    %751 = vmatpush1.msra.mxu0 0.0
    %752 = vmatprep.subr.mxu0 0.0
    %753 = vmatpush1.msra.mxu0 0.0
    %754 = vmatprep.subr.mxu0 0.0
    %755 = vmatpush1.msra.mxu0 0.0
    %756 = vmatprep.subr.mxu0 0.0
    %757 = vmatpush1.msra.mxu0 0.0
    %758 = vmatprep.subr.mxu0 0.0
    %759 = vmatpush1.msra.mxu0 0.0
    %760 = vmatprep.subr.mxu0 0.0
    %761 = vmatpush1.msra.mxu0 0.0
    %762 = vmatprep.subr.mxu0 0.0
    %763 = vmatpush1.msra.mxu0 0.0
    %764 = vmatprep.subr.mxu0 0.0
    %765 = vmatpush1.msra.mxu0 0.0
    %766 = vmatprep.subr.mxu0 0.0
    %767 = vmatpush1.msra.mxu0 0.0
    %768 = vmatprep.subr.mxu0 0.0
    %769 = vmatpush1.msra.mxu0 0.0
    %770 = vmatprep.subr.mxu0 0.0
    %771 = vmatpush1.msra.mxu0 0.0
    %772 = vmatprep.subr.mxu0 0.0
    %773 = vmatpush1.msra.mxu0 0.0
    %774 = vmatprep.subr.mxu0 0.0
    %775 = vmatpush1.msra.mxu0 0.0
    %776 = vmatprep.subr.mxu0 0.0
    %777 = vmatpush1.msra.mxu0 0.0
    %778 = vmatprep.subr.mxu0 0.0
    %779 = vmatpush1.msra.mxu0 0.0
    %780 = vmatprep.subr.mxu0 0.0
    %781 = vmatpush1.msra.mxu0 0.0
    %782 = vmatprep.subr.mxu0 0.0
    %783 = vmatpush1.msra.mxu0 0.0
    %784 = vmatprep.subr.mxu0 0.0
    %785 = vmatpush1.msra.mxu0 0.0
    %786 = vmatprep.subr.mxu0 0.0
    %787 = vmatpush1.msra.mxu0 0.0
    %788 = vmatprep.mubr.f32.mxu0 0.0
    %789 = vmatmul.mubr.f32.gmra.mrb[0].mxu0 %v720
    %v790 = vpop.f32.mrb[0].mxu0
    %v791 = vadd.f32 %v713, %v790
    %v792 = vpop.f32.mrb[0].mxu0
    %793 = vmatprep.mubr.f32.mxu0 0.0
    %794 = vmatmul.mubr.f32.gmra.mrb[0].mxu0 %v722
    %v795 = vpop.f32.mrb[0].mxu0
    %v796 = vadd.f32 %v718, %v795
    %v797 = vpop.f32.mrb[0].mxu0
    %798 = vdwg.mxu0
    %v799 = vadd.f32 %v791, %v508
    %v800 = vadd.f32 %v796, %v509
    %v801 = vxor.u32 %v799, 2147483648
    %v802 = vmul.f32 %v801, 1.442695
    %v803 = vpow.pop %v802
    %v804 = vadd.f32 %v803, 1.0
    %v805 = vrcp.pop %v804
    %v806 = vmul.f32 1.0, %v805
    %v807 = vtanh.pop %v800
    %v808 = vmul.f32 %v806, %v807
    %v809 = vld [vmem:[%s1 + $0x88] sm:$0xff]
    %v810 = vld [vmem:[%s1 + $0x90] sm:$0xff]
    %812 = vset.pattern.permute.xlu0 8
    %813 = vperm.xlu0 %812, %v809
    %v814 = vpop.permute.xlu0 %813
    %816 = vset.pattern.permute.xlu0 8
    %817 = vperm.xlu0 %816, %v810
    %v818 = vpop.permute.xlu0 %817
    %v820 = vsel %vm523, %v809, 0
    %v822 = vsel %vm523, %v810, 0
    %824 = vmatprep.subr.mxu0 0.0
    %825 = vmatpush1.msra.mxu0 %v808
    %826 = vmatprep.subr.mxu0 0.0
    %827 = vmatpush1.msra.mxu0 0.0
    %828 = vmatprep.subr.mxu0 0.0
    %829 = vmatpush1.msra.mxu0 0.0
    %830 = vmatprep.subr.mxu0 0.0
    %831 = vmatpush1.msra.mxu0 0.0
    %832 = vmatprep.subr.mxu0 0.0
    %833 = vmatpush1.msra.mxu0 0.0
    %834 = vmatprep.subr.mxu0 0.0
    %835 = vmatpush1.msra.mxu0 0.0
    %836 = vmatprep.subr.mxu0 0.0
    %837 = vmatpush1.msra.mxu0 0.0
    %838 = vmatprep.subr.mxu0 0.0
    %839 = vmatpush1.msra.mxu0 0.0
    %840 = vmatprep.subr.mxu0 0.0
    %841 = vmatpush1.msra.mxu0 0.0
    %842 = vmatprep.subr.mxu0 0.0
    %843 = vmatpush1.msra.mxu0 0.0
    %844 = vmatprep.subr.mxu0 0.0
    %845 = vmatpush1.msra.mxu0 0.0
    %846 = vmatprep.subr.mxu0 0.0
    %847 = vmatpush1.msra.mxu0 0.0
    %848 = vmatprep.subr.mxu0 0.0
    %849 = vmatpush1.msra.mxu0 0.0
    %850 = vmatprep.subr.mxu0 0.0
    %851 = vmatpush1.msra.mxu0 0.0
    %852 = vmatprep.subr.mxu0 0.0
    %853 = vmatpush1.msra.mxu0 0.0
    %854 = vmatprep.subr.mxu0 0.0
    %855 = vmatpush1.msra.mxu0 0.0
    %856 = vmatprep.subr.mxu0 0.0
    %857 = vmatpush1.msra.mxu0 0.0
    %858 = vmatprep.subr.mxu0 0.0
    %859 = vmatpush1.msra.mxu0 0.0
    %860 = vmatprep.subr.mxu0 0.0
    %861 = vmatpush1.msra.mxu0 0.0
    %862 = vmatprep.subr.mxu0 0.0
    %863 = vmatpush1.msra.mxu0 0.0
    %864 = vmatprep.subr.mxu0 0.0
    %865 = vmatpush1.msra.mxu0 0.0
    %866 = vmatprep.subr.mxu0 0.0
    %867 = vmatpush1.msra.mxu0 0.0
    %868 = vmatprep.subr.mxu0 0.0
    %869 = vmatpush1.msra.mxu0 0.0
    %870 = vmatprep.subr.mxu0 0.0
    %871 = vmatpush1.msra.mxu0 0.0
    %872 = vmatprep.subr.mxu0 0.0
    %873 = vmatpush1.msra.mxu0 0.0
    %874 = vmatprep.subr.mxu0 0.0
    %875 = vmatpush1.msra.mxu0 0.0
    %876 = vmatprep.subr.mxu0 0.0
    %877 = vmatpush1.msra.mxu0 0.0
    %878 = vmatprep.subr.mxu0 0.0
    %879 = vmatpush1.msra.mxu0 0.0
    %880 = vmatprep.subr.mxu0 0.0
    %881 = vmatpush1.msra.mxu0 0.0
    %882 = vmatprep.subr.mxu0 0.0
    %883 = vmatpush1.msra.mxu0 0.0
    %884 = vmatprep.subr.mxu0 0.0
    %885 = vmatpush1.msra.mxu0 0.0
    %886 = vmatprep.subr.mxu0 0.0
    %887 = vmatpush1.msra.mxu0 0.0
    %888 = vmatprep.mubr.f32.mxu0 0.0
    %889 = vmatmul.mubr.f32.gmra.mrb[0].mxu0 %v820
    %v890 = vpop.f32.mrb[0].mxu0
    %v891 = vpop.f32.mrb[0].mxu0
    %892 = vmatprep.mubr.f32.mxu0 0.0
    %893 = vmatmul.mubr.f32.gmra.mrb[0].mxu0 %v822
    %v894 = vpop.f32.mrb[0].mxu0
    %v895 = vadd.f32 %v818, %v894
    %v896 = vpop.f32.mrb[0].mxu0
    %897 = vdwg.mxu0
    %v898 = vadd.f32 %v706, %v895
    %v899 = vmul.f32 %v898, 0.70710677
    %v900 = vld [vmem:[%s1 + $0x98] sm:$0xff]
    %902 = vset.pattern.permute.xlu0 8
    %903 = vperm.xlu0 %902, %v900
    %v904 = vpop.permute.xlu0 %903
    %v906 = vsel %vm523, %v900, 0
    %908 = vmatprep.subr.mxu0 0.0
    %909 = vmatpush1.msra.mxu0 %v899
    %910 = vmatprep.subr.mxu0 0.0
    %911 = vmatpush1.msra.mxu0 0.0
    %912 = vmatprep.subr.mxu0 0.0
    %913 = vmatpush1.msra.mxu0 0.0
    %914 = vmatprep.subr.mxu0 0.0
    %915 = vmatpush1.msra.mxu0 0.0
    %916 = vmatprep.subr.mxu0 0.0
    %917 = vmatpush1.msra.mxu0 0.0
    %918 = vmatprep.subr.mxu0 0.0
    %919 = vmatpush1.msra.mxu0 0.0
    %920 = vmatprep.subr.mxu0 0.0
    %921 = vmatpush1.msra.mxu0 0.0
    %922 = vmatprep.subr.mxu0 0.0
    %923 = vmatpush1.msra.mxu0 0.0
    %924 = vmatprep.subr.mxu0 0.0
    %925 = vmatpush1.msra.mxu0 0.0
    %926 = vmatprep.subr.mxu0 0.0
    %927 = vmatpush1.msra.mxu0 0.0
    %928 = vmatprep.subr.mxu0 0.0
    %929 = vmatpush1.msra.mxu0 0.0
    %930 = vmatprep.subr.mxu0 0.0
    %931 = vmatpush1.msra.mxu0 0.0
    %932 = vmatprep.subr.mxu0 0.0
    %933 = vmatpush1.msra.mxu0 0.0
    %934 = vmatprep.subr.mxu0 0.0
    %935 = vmatpush1.msra.mxu0 0.0
    %936 = vmatprep.subr.mxu0 0.0
    %937 = vmatpush1.msra.mxu0 0.0
    %938 = vmatprep.subr.mxu0 0.0
    %939 = vmatpush1.msra.mxu0 0.0
    %940 = vmatprep.subr.mxu0 0.0
    %941 = vmatpush1.msra.mxu0 0.0
    %942 = vmatprep.subr.mxu0 0.0
    %943 = vmatpush1.msra.mxu0 0.0
    %944 = vmatprep.subr.mxu0 0.0
    %945 = vmatpush1.msra.mxu0 0.0
    %946 = vmatprep.subr.mxu0 0.0
    %947 = vmatpush1.msra.mxu0 0.0
    %948 = vmatprep.subr.mxu0 0.0
    %949 = vmatpush1.msra.mxu0 0.0
    %950 = vmatprep.subr.mxu0 0.0
    %951 = vmatpush1.msra.mxu0 0.0
    %952 = vmatprep.subr.mxu0 0.0
    %953 = vmatpush1.msra.mxu0 0.0
    %954 = vmatprep.subr.mxu0 0.0
    %955 = vmatpush1.msra.mxu0 0.0
    %956 = vmatprep.subr.mxu0 0.0
    %957 = vmatpush1.msra.mxu0 0.0
    %958 = vmatprep.subr.mxu0 0.0
    %959 = vmatpush1.msra.mxu0 0.0
    %960 = vmatprep.subr.mxu0 0.0
    %961 = vmatpush1.msra.mxu0 0.0
    %962 = vmatprep.subr.mxu0 0.0
    %963 = vmatpush1.msra.mxu0 0.0
    %964 = vmatprep.subr.mxu0 0.0
    %965 = vmatpush1.msra.mxu0 0.0
    %966 = vmatprep.subr.mxu0 0.0
    %967 = vmatpush1.msra.mxu0 0.0
    %968 = vmatprep.subr.mxu0 0.0
    %969 = vmatpush1.msra.mxu0 0.0
    %970 = vmatprep.subr.mxu0 0.0
    %971 = vmatpush1.msra.mxu0 0.0
    %972 = vmatprep.mubr.f32.mxu0 0.0
    %973 = vmatmul.mubr.f32.gmra.mrb[0].mxu0 %v906
    %v974 = vpop.f32.mrb[0].mxu0
    %v975 = vadd.f32 %v904, %v974
    %v976 = vpop.f32.mrb[0].mxu0
    %977 = vdwg.mxu0
    %v978 = vmax.f32 %v975, 0.0
    %v979 = vld [vmem:[%s1 + $0xa0] sm:$0xff]
    %981 = vset.pattern.permute.xlu0 0
    %982 = vperm.xlu0 %981, %v979
    %v983 = vpop.permute.xlu0 %982
    %v985 = vmul.f32 %v983, %v978
    %vm986 = vcmask 523264
    %v987 = vsel %vm986, %v985, 0.0
    %v988 = vrot.slane %v987, 4
    %v989 = vadd.f32 %v987, %v988
    %v990 = vrot.slane %v989, 2
    %v991 = vadd.f32 %v989, %v990
    %v992 = vrot.slane %v991, 1
    %v993 = vadd.f32 %v991, %v992
    %v994 = vld [vmem:[%s1 + $0xa0] sm:$0x1]
    %996 = vset.pattern.permute.xlu0 1
    %997 = vperm.xlu0 %996, %v994
    %v998 = vpop.permute.xlu0 %997
    %v1000 = vadd.f32 %v993, %v998
    %v1002 = vrot.slane %v1000, 7
    %v1004 = vsub.f32 %v12, %v1002
    %v1005 = vrot.slane %v12, 2
    %v1007 = vmul.f32 %v1004, %v1005
    %v1008 = vmul.f32 %v1007, %v1007
    %v1010 = vrot.slane %v1008, 1
    %vm1012 = vcmask 516096
    %v1013 = vsel %vm1012, %v1010, 0.0
    %1014 = vadd.xlane.f32.xlu0 %v1013
    %v1015 = vpop.xlane.xlu0 %1014
    %v1016 = vrot.slane %v1015, 4
    %v1017 = vadd.f32 %v1015, %v1016
    %v1018 = vrot.slane %v1017, 2
    %v1019 = vadd.f32 %v1017, %v1018
    %v1020 = vrot.slane %v1019, 1
    %v1021 = vadd.f32 %v1019, %v1020
    %s1022 = vtos %v1021
    %v1023 = vrot.slane %v12, 3
    %v1025 = vsel %vm1012, %v1023, 0.0
    %1026 = vadd.xlane.f32.xlu0 %v1025
    %v1027 = vpop.xlane.xlu0 %1026
    %v1028 = vrot.slane %v1027, 4
    %v1029 = vadd.f32 %v1027, %v1028
    %v1030 = vrot.slane %v1029, 2
    %v1031 = vadd.f32 %v1029, %v1030
    %v1032 = vrot.slane %v1031, 1
    %v1033 = vadd.f32 %v1031, %v1032
    %s1034 = vtos %v1033
    %s1035 = smax.f32 %s1034, 1.0
    %v1036 = vstv %s1035
    %v1037 = vrcp.pop %v1036
    %s1038 = vtos %v1037
    %s1039 = smul.f32 %s1022, %s1038
    %s1040 = scalar_lea.smem [#allocation2], 0
    %1041 = sst [smem:[%s1040]] %s1039
    // Predicated region
    $region10: #{forward_train.3} parent=1 // pred_check
      _
    $region11: #{forward_train.3} parent=1 // pred_check_branch
      %1043 = sbr.rel (0) target = $region13
    $region12: #{forward_train.3} parent=1 // pred_region
      %s1045 = ssub.s32 16, 16
      %1046 = vsyncadd [#allocation3], %s1045
      %1049 = dma.smem_to_hbm [#allocation2], 16, %s2, [#allocation3]
    $region13: #{forward_train.3} parent=1 // pred_fallthru
      _
    // Predicated region
    $region14: #{forward_train.3} parent=1 // pred_check
      _
    $region15: #{forward_train.3} parent=1 // pred_check_branch
      %1051 = sbr.rel (0) target = $region17
    $region16: #{forward_train.3} parent=1 // pred_region
      %1052 = dma.done [#allocation3], 16
    $region17: #{forward_train.3} parent=1 // pred_fallthru
      _
    %1053 = sfence
    %1054 = vsyncpa [#allocation3], 1

</llo_original>
